<compile_context>
chip_gen: v7x
topology: tpu7x:2x2x1
jax: 0.10.0
libtpu: 0.0.40
codegen_flags: <defaults>
</compile_context>

<pallas_src>
import functools
import math

import jax
import jax.numpy as jnp
from jax.experimental import pallas as pl
from jax.experimental.pallas import tpu as pltpu


_INV_SQRT2 = 0.7071067811865476


# --------------------------------------------------------------------------- #
# GELU (exact, via an erf polynomial that lowers everywhere)
# --------------------------------------------------------------------------- #
def _erf(x):
    """Abramowitz & Stegun 7.1.26, max abs error ~1.5e-7 (<< 1e-4 tolerance).

    Built from exp / mul / add / div / where only, so it is guaranteed to
    lower inside Mosaic on every TPU generation.
    """
    a1, a2, a3, a4, a5 = (0.254829592, -0.284496736, 1.421413741,
                          -1.453152027, 1.061405429)
    p = 0.3275911
    sgn = jnp.where(x < 0.0, -1.0, 1.0)
    z = jnp.abs(x)
    t = 1.0 / (1.0 + p * z)
    poly = ((((a5 * t + a4) * t + a3) * t + a2) * t + a1) * t
    return sgn * (1.0 - poly * jnp.exp(-z * z))


def _gelu(x, use_tanh):
    if use_tanh:
        # tanh variant uses the (otherwise idle) EUP slot; slight numerics
        # difference vs PyTorch's exact GELU.
        return jax.nn.gelu(x, approximate=True)
    return 0.5 * x * (1.0 + _erf(x * _INV_SQRT2))       # exact (erf) GELU


# --------------------------------------------------------------------------- #
# Kernels
# --------------------------------------------------------------------------- #
def _fused_kernel(x_ref, w_ref, o_ref, *, use_tanh_gelu):
    """One grid step == the full layer chain for one M tile.

    x_ref: (TM, Wp)           input activations for this tile (x.dtype)
    w_ref: (depth, Wp, Wp)    all weights, whole-array resident in VMEM
    o_ref: (TM, Wp) x.dtype   output tile
    """
    depth = w_ref.shape[0]
    cdt = w_ref.dtype                                    # MXU operand dtype
    y = x_ref[...]
    for i in range(depth):                               # static unroll
        y = jnp.dot(y.astype(cdt), w_ref[i],
                    preferred_element_type=jnp.float32)
        if i < depth - 1:
            y = _gelu(y, use_tanh_gelu)
    o_ref[...] = y.astype(o_ref.dtype)


def _streamed_kernel(x_ref, w_ref, o_ref, acc_ref, *, use_tanh_gelu):
    """One grid step == one layer for one M tile.

    x_ref:   (TM, Wp)           input activations (read only at layer 0)
    w_ref:   (Wp, Wp)           this layer's weight (depth dim squeezed)
    o_ref:   (TM, Wp) x.dtype   written once, at the last layer
    acc_ref: (TM, Wp) cdt       VMEM scratch: layer-to-layer activation carrier
    """
    layer = pl.program_id(1)
    last = pl.num_programs(1) - 1
    cdt = w_ref.dtype

    def step(lhs):
        y = jnp.dot(lhs.astype(cdt), w_ref[...],
                    preferred_element_type=jnp.float32)

        @pl.when(layer != last)
        def _():
            acc_ref[...] = _gelu(y, use_tanh_gelu).astype(acc_ref.dtype)

        @pl.when(layer == last)
        def _():
            o_ref[...] = y.astype(o_ref.dtype)

    @pl.when(layer == 0)           # no layer-0 store/reload round trip
    def _():
        step(x_ref[...])

    @pl.when(layer > 0)
    def _():
        step(acc_ref[...])


# --------------------------------------------------------------------------- #
# Sizing helpers
# --------------------------------------------------------------------------- #
def _round_up(v, m):
    return ((v + m - 1) // m) * m


def _vmem_capacity_bytes():
    try:
        return int(pltpu.get_tpu_info().vmem_capacity_bytes)
    except Exception:
        return 64 << 20          # conservative (v7x per-TensorCore VMEM)


# --------------------------------------------------------------------------- #
# Wrapper
# --------------------------------------------------------------------------- #
def memory_bloc_forward(x, weights, *, use_bf16_matmul=True,
                        use_tanh_gelu=False, path=None):
    """x: (..., width); weights: (depth, width, width).  Returns x.dtype."""
    *lead, width = x.shape
    depth = weights.shape[0]
    m = int(math.prod(lead)) if lead else 1
    x2d = x.reshape(m, width)

    # bf16 MXU operands by default (f32 accumulation kept in the kernels).
    cdtype = jnp.bfloat16 if use_bf16_matmul else jnp.float32
    w = weights.astype(cdtype)

    # Lane-dense padding: W -> multiple of 128 (unmasked vst, full MXU lanes).
    wp = _round_up(width, 128)

    # --- generation-aware VMEM plan -------------------------------------- #
    cap = _vmem_capacity_bytes()                 # 128 MiB v5e/v6e, 64 MiB v7x
    budget = min(int(cap * 0.75), 96 << 20)      # ~96 MiB / ~48 MiB plans
    vmem_limit = min(cap, budget + (8 << 20))

    x_bytes = jnp.dtype(x.dtype).itemsize
    w_bytes = jnp.dtype(w.dtype).itemsize
    o_bytes = x_bytes
    weight_total = depth * wp * wp * w_bytes     # single resident copy

    if 2 * wp * wp * w_bytes > budget:
        # TODO(synk): add contraction-axis (K/N) tiling for very large width.
        raise ValueError(f"width={width} too large for single-weight VMEM "
                         f"residency (budget {budget} bytes)")

    if path is None:
        path = "fused" if weight_total <= int(budget * 0.6) else "streamed"

    if path == "fused":
        fixed = weight_total                               # whole-array VMEM
        per_row = wp * (2 * x_bytes + 2 * o_bytes + 3 * 4)  # in/out dbl-buf + temps
    else:
        fixed = 2 * wp * wp * w_bytes                      # dbl-buffered weight
        per_row = wp * (2 * x_bytes + 2 * o_bytes + w_bytes + 2 * 4)

    tm = max(8, ((budget - fixed) // per_row // 8) * 8)
    tm = min(tm, 2048)                                     # amortization cap
    m8 = _round_up(m, 8)
    tm = min(tm, m8)
    if tm >= m8 and m8 >= 16:
        tm = _round_up(m8 // 2, 8)                         # grid_m >= 2 (megacore)
    grid_m = -(-m // tm)
    m_pad = grid_m * tm

    # Pad activations / weights (GELU(0)=0, so padding stays zero).
    if m_pad != m or wp != width:
        x2d = jnp.pad(x2d, ((0, m_pad - m), (0, wp - width)))
    if wp != width:
        w = jnp.pad(w, ((0, 0), (0, wp - width), (0, wp - width)))

    out_dtype = x.dtype
    compiler_params = pltpu.CompilerParams(
        dimension_semantics=(("parallel",) if path == "fused"
                             else ("parallel", "arbitrary")),
        vmem_limit_bytes=vmem_limit,
    )

    if path == "fused":
        kern = functools.partial(_fused_kernel, use_tanh_gelu=use_tanh_gelu)
        out2d = pl.pallas_call(
            kern,
            out_shape=jax.ShapeDtypeStruct((m_pad, wp), out_dtype),
            grid_spec=pltpu.PrefetchScalarGridSpec(
                num_scalar_prefetch=0,
                grid=(grid_m,),
                in_specs=[
                    pl.BlockSpec((tm, wp), lambda i: (i, 0)),
                    # Whole stacked-weight array resident in VMEM (no 2x
                    # double-buffer allocation -> more headroom on v7x).
                    pl.BlockSpec(memory_space=pltpu.MemorySpace.VMEM),
                ],
                out_specs=pl.BlockSpec((tm, wp), lambda i: (i, 0)),
            ),
            compiler_params=compiler_params,
        )(x2d, w)
    else:  # "streamed"
        kern = functools.partial(_streamed_kernel, use_tanh_gelu=use_tanh_gelu)
        out2d = pl.pallas_call(
            kern,
            out_shape=jax.ShapeDtypeStruct((m_pad, wp), out_dtype),
            grid_spec=pltpu.PrefetchScalarGridSpec(
                num_scalar_prefetch=0,
                grid=(grid_m, depth),
                in_specs=[
                    pl.BlockSpec((tm, wp), lambda i, j: (i, 0)),
                    pl.BlockSpec((pl.Squeezed(), wp, wp),
                                 lambda i, j: (j, 0, 0)),
                ],
                out_specs=pl.BlockSpec((tm, wp), lambda i, j: (i, 0)),
                scratch_shapes=[pltpu.VMEM((tm, wp), cdtype)],
            ),
            compiler_params=compiler_params,
        )(x2d, w)

    out = out2d[:m, :width]
    return out.reshape(*lead, width) if lead else out.reshape(width)


# --------------------------------------------------------------------------- #
# Init + reference
# --------------------------------------------------------------------------- #
def init_weights(key, depth, width):
    """Deterministic xavier_uniform init for `depth` (width, width) matrices."""
    bound = math.sqrt(6.0 / (width + width))
    keys = jax.random.split(key, depth)
    ws = [jax.random.uniform(k, (width, width), jnp.float32, -bound, bound)
          for k in keys]
    return jnp.stack(ws, axis=0)  # (depth, width, width)


def memory_bloc_reference(x, weights):
    depth = weights.shape[0]
    y = x
    for i in range(depth):
        y = jnp.matmul(y, weights[i])
        if i < depth - 1:
            y = jax.nn.gelu(y, approximate=False)
    return y


# TODO(synk): MemoryBloc.update / zero_grad / get_weights are training-side
# autograd utilities (inner-loop SGD on the weight buffers), not part of the
# forward pass; they are not translated to Pallas.

if __name__ == "__main__":
    depth = 4
    width = 32
    batch = 2
    seq = 8

    key = jax.random.PRNGKey(0)
    k_x, k_w = jax.random.split(key)
    x = jax.random.normal(k_x, (batch, seq, width), jnp.float32)
    weights = init_weights(k_w, depth, width)

    ref = memory_bloc_reference(x, weights)

    # f32-operand paths: bit-accurate check of kernel structure (both paths).
    out_f32_fused = jax.block_until_ready(
        memory_bloc_forward(x, weights, use_bf16_matmul=False, path="fused"))
    out_f32_streamed = jax.block_until_ready(
        memory_bloc_forward(x, weights, use_bf16_matmul=False, path="streamed"))
    assert out_f32_fused.shape == ref.shape
    assert jnp.allclose(out_f32_fused, ref, atol=1e-4, rtol=1e-4), \
        "f32 fused mismatch"
    assert jnp.allclose(out_f32_streamed, ref, atol=1e-4, rtol=1e-4), \
        "f32 streamed mismatch"

    # Default (bf16 MXU operands, f32 accumulation): bf16-appropriate tol.
    out_bf16 = jax.block_until_ready(memory_bloc_forward(x, weights))
    assert out_bf16.shape == ref.shape
    assert jnp.allclose(out_bf16, ref, atol=5e-2, rtol=5e-2), \
        "bf16 mismatch"

    print("KERNEL_OK")
</pallas_src>

<mosaic_0001>
module attributes {stable_mosaic.version = 11 : i64} {
  func.func @_fused_kernel(%arg0: i32, %arg1: memref<8x128xf32, #tpu.memory_space<vmem>>, %arg2: memref<4x128x128xf32, #tpu.memory_space<vmem>>, %arg3: memref<8x128xf32, #tpu.memory_space<vmem>>) attributes {dimension_semantics = [#tpu.dimension_semantics<parallel>], iteration_bounds = array<i64: 2>, scalar_prefetch = 0 : i64, scratch_operands = 0 : i64, tpu.core_type = #tpu.core_type<tc>, window_params = [{transform_indices = @transform_0, window_bounds = array<i64: 8, 128>}, {pipeline_mode = #tpu.pipeline_mode<synchronous>, transform_indices = @transform_1, window_bounds = array<i64: 4, 128, 128>}, {transform_indices = @transform_2, window_bounds = array<i64: 8, 128>}]} {
    %c0 = arith.constant 0 : index
    %c0_0 = arith.constant 0 : index
    %0 = vector.load %arg1[%c0, %c0_0] : memref<8x128xf32, #tpu.memory_space<vmem>>, vector<8x128xf32>
    %c0_1 = arith.constant 0 : index
    %c0_2 = arith.constant 0 : index
    %c0_3 = arith.constant 0 : index
    %1 = vector.load %arg2[%c0_1, %c0_2, %c0_3] : memref<4x128x128xf32, #tpu.memory_space<vmem>>, vector<1x128x128xf32>
    %2 = vector.shape_cast %1 : vector<1x128x128xf32> to vector<128x128xf32>
    %cst = arith.constant dense<0.000000e+00> : vector<8x128xf32>
    %3 = tpu.matmul %0, %2, %cst {dimension_numbers = #tpu.dot_dimension_numbers<[1], [0], [0], [1], [0, 0, 1, 1], [], []>} : vector<8x128xf32>, vector<128x128xf32>, vector<8x128xf32> -> vector<8x128xf32>
    %cst_4 = arith.constant 5.000000e-01 : f32
    %4 = vector.broadcast %cst_4 : f32 to vector<8x128xf32>
    %5 = arith.mulf %4, %3 : vector<8x128xf32>
    %cst_5 = arith.constant 0.707106769 : f32
    %6 = vector.broadcast %cst_5 : f32 to vector<8x128xf32>
    %7 = arith.mulf %3, %6 : vector<8x128xf32>
    %cst_6 = arith.constant 0.000000e+00 : f32
    %8 = vector.broadcast %cst_6 : f32 to vector<8x128xf32>
    %9 = arith.cmpf olt, %7, %8 : vector<8x128xf32>
    %cst_7 = arith.constant -1.000000e+00 : f32
    %cst_8 = arith.constant 1.000000e+00 : f32
    %10 = vector.broadcast %cst_7 : f32 to vector<8x128xf32>
    %11 = vector.broadcast %cst_8 : f32 to vector<8x128xf32>
    %12 = arith.select %9, %10, %11 : vector<8x128xi1>, vector<8x128xf32>
    %13 = math.absf %7 : vector<8x128xf32>
    %cst_9 = arith.constant 0.327591091 : f32
    %14 = vector.broadcast %cst_9 : f32 to vector<8x128xf32>
    %15 = arith.mulf %14, %13 : vector<8x128xf32>
    %cst_10 = arith.constant 1.000000e+00 : f32
    %16 = vector.broadcast %cst_10 : f32 to vector<8x128xf32>
    %17 = arith.addf %16, %15 : vector<8x128xf32>
    %cst_11 = arith.constant 1.000000e+00 : f32
    %18 = vector.broadcast %cst_11 : f32 to vector<8x128xf32>
    %19 = arith.divf %18, %17 : vector<8x128xf32>
    %cst_12 = arith.constant 1.06140542 : f32
    %20 = vector.broadcast %cst_12 : f32 to vector<8x128xf32>
    %21 = arith.mulf %20, %19 : vector<8x128xf32>
    %cst_13 = arith.constant -1.45315206 : f32
    %22 = vector.broadcast %cst_13 : f32 to vector<8x128xf32>
    %23 = arith.addf %21, %22 : vector<8x128xf32>
    %24 = arith.mulf %23, %19 : vector<8x128xf32>
    %cst_14 = arith.constant 1.42141378 : f32
    %25 = vector.broadcast %cst_14 : f32 to vector<8x128xf32>
    %26 = arith.addf %24, %25 : vector<8x128xf32>
    %27 = arith.mulf %26, %19 : vector<8x128xf32>
    %cst_15 = arith.constant -0.284496725 : f32
    %28 = vector.broadcast %cst_15 : f32 to vector<8x128xf32>
    %29 = arith.addf %27, %28 : vector<8x128xf32>
    %30 = arith.mulf %29, %19 : vector<8x128xf32>
    %cst_16 = arith.constant 0.254829586 : f32
    %31 = vector.broadcast %cst_16 : f32 to vector<8x128xf32>
    %32 = arith.addf %30, %31 : vector<8x128xf32>
    %33 = arith.mulf %32, %19 : vector<8x128xf32>
    %cst_17 = arith.constant 0.000000e+00 : f32
    %34 = vector.broadcast %cst_17 : f32 to vector<8x128xf32>
    %35 = arith.subf %34, %13 : vector<8x128xf32>
    %36 = arith.mulf %35, %13 : vector<8x128xf32>
    %37 = math.exp %36 : vector<8x128xf32>
    %38 = arith.mulf %33, %37 : vector<8x128xf32>
    %cst_18 = arith.constant 1.000000e+00 : f32
    %39 = vector.broadcast %cst_18 : f32 to vector<8x128xf32>
    %40 = arith.subf %39, %38 : vector<8x128xf32>
    %41 = arith.mulf %12, %40 : vector<8x128xf32>
    %cst_19 = arith.constant 1.000000e+00 : f32
    %42 = vector.broadcast %cst_19 : f32 to vector<8x128xf32>
    %43 = arith.addf %42, %41 : vector<8x128xf32>
    %44 = arith.mulf %5, %43 : vector<8x128xf32>
    %c1 = arith.constant 1 : index
    %c0_20 = arith.constant 0 : index
    %c0_21 = arith.constant 0 : index
    %45 = vector.load %arg2[%c1, %c0_20, %c0_21] : memref<4x128x128xf32, #tpu.memory_space<vmem>>, vector<1x128x128xf32>
    %46 = vector.shape_cast %45 : vector<1x128x128xf32> to vector<128x128xf32>
    %cst_22 = arith.constant dense<0.000000e+00> : vector<8x128xf32>
    %47 = tpu.matmul %44, %46, %cst_22 {dimension_numbers = #tpu.dot_dimension_numbers<[1], [0], [0], [1], [0, 0, 1, 1], [], []>} : vector<8x128xf32>, vector<128x128xf32>, vector<8x128xf32> -> vector<8x128xf32>
    %cst_23 = arith.constant 5.000000e-01 : f32
    %48 = vector.broadcast %cst_23 : f32 to vector<8x128xf32>
    %49 = arith.mulf %48, %47 : vector<8x128xf32>
    %cst_24 = arith.constant 0.707106769 : f32
    %50 = vector.broadcast %cst_24 : f32 to vector<8x128xf32>
    %51 = arith.mulf %47, %50 : vector<8x128xf32>
    %cst_25 = arith.constant 0.000000e+00 : f32
    %52 = vector.broadcast %cst_25 : f32 to vector<8x128xf32>
    %53 = arith.cmpf olt, %51, %52 : vector<8x128xf32>
    %cst_26 = arith.constant -1.000000e+00 : f32
    %cst_27 = arith.constant 1.000000e+00 : f32
    %54 = vector.broadcast %cst_26 : f32 to vector<8x128xf32>
    %55 = vector.broadcast %cst_27 : f32 to vector<8x128xf32>
    %56 = arith.select %53, %54, %55 : vector<8x128xi1>, vector<8x128xf32>
    %57 = math.absf %51 : vector<8x128xf32>
    %cst_28 = arith.constant 0.327591091 : f32
    %58 = vector.broadcast %cst_28 : f32 to vector<8x128xf32>
    %59 = arith.mulf %58, %57 : vector<8x128xf32>
    %cst_29 = arith.constant 1.000000e+00 : f32
    %60 = vector.broadcast %cst_29 : f32 to vector<8x128xf32>
    %61 = arith.addf %60, %59 : vector<8x128xf32>
    %cst_30 = arith.constant 1.000000e+00 : f32
    %62 = vector.broadcast %cst_30 : f32 to vector<8x128xf32>
    %63 = arith.divf %62, %61 : vector<8x128xf32>
    %cst_31 = arith.constant 1.06140542 : f32
    %64 = vector.broadcast %cst_31 : f32 to vector<8x128xf32>
    %65 = arith.mulf %64, %63 : vector<8x128xf32>
    %cst_32 = arith.constant -1.45315206 : f32
    %66 = vector.broadcast %cst_32 : f32 to vector<8x128xf32>
    %67 = arith.addf %65, %66 : vector<8x128xf32>
    %68 = arith.mulf %67, %63 : vector<8x128xf32>
    %cst_33 = arith.constant 1.42141378 : f32
    %69 = vector.broadcast %cst_33 : f32 to vector<8x128xf32>
    %70 = arith.addf %68, %69 : vector<8x128xf32>
    %71 = arith.mulf %70, %63 : vector<8x128xf32>
    %cst_34 = arith.constant -0.284496725 : f32
    %72 = vector.broadcast %cst_34 : f32 to vector<8x128xf32>
    %73 = arith.addf %71, %72 : vector<8x128xf32>
    %74 = arith.mulf %73, %63 : vector<8x128xf32>
    %cst_35 = arith.constant 0.254829586 : f32
    %75 = vector.broadcast %cst_35 : f32 to vector<8x128xf32>
    %76 = arith.addf %74, %75 : vector<8x128xf32>
    %77 = arith.mulf %76, %63 : vector<8x128xf32>
    %cst_36 = arith.constant 0.000000e+00 : f32
    %78 = vector.broadcast %cst_36 : f32 to vector<8x128xf32>
    %79 = arith.subf %78, %57 : vector<8x128xf32>
    %80 = arith.mulf %79, %57 : vector<8x128xf32>
    %81 = math.exp %80 : vector<8x128xf32>
    %82 = arith.mulf %77, %81 : vector<8x128xf32>
    %cst_37 = arith.constant 1.000000e+00 : f32
    %83 = vector.broadcast %cst_37 : f32 to vector<8x128xf32>
    %84 = arith.subf %83, %82 : vector<8x128xf32>
    %85 = arith.mulf %56, %84 : vector<8x128xf32>
    %cst_38 = arith.constant 1.000000e+00 : f32
    %86 = vector.broadcast %cst_38 : f32 to vector<8x128xf32>
    %87 = arith.addf %86, %85 : vector<8x128xf32>
    %88 = arith.mulf %49, %87 : vector<8x128xf32>
    %c2 = arith.constant 2 : index
    %c0_39 = arith.constant 0 : index
    %c0_40 = arith.constant 0 : index
    %89 = vector.load %arg2[%c2, %c0_39, %c0_40] : memref<4x128x128xf32, #tpu.memory_space<vmem>>, vector<1x128x128xf32>
    %90 = vector.shape_cast %89 : vector<1x128x128xf32> to vector<128x128xf32>
    %cst_41 = arith.constant dense<0.000000e+00> : vector<8x128xf32>
    %91 = tpu.matmul %88, %90, %cst_41 {dimension_numbers = #tpu.dot_dimension_numbers<[1], [0], [0], [1], [0, 0, 1, 1], [], []>} : vector<8x128xf32>, vector<128x128xf32>, vector<8x128xf32> -> vector<8x128xf32>
    %cst_42 = arith.constant 5.000000e-01 : f32
    %92 = vector.broadcast %cst_42 : f32 to vector<8x128xf32>
    %93 = arith.mulf %92, %91 : vector<8x128xf32>
    %cst_43 = arith.constant 0.707106769 : f32
    %94 = vector.broadcast %cst_43 : f32 to vector<8x128xf32>
    %95 = arith.mulf %91, %94 : vector<8x128xf32>
    %cst_44 = arith.constant 0.000000e+00 : f32
    %96 = vector.broadcast %cst_44 : f32 to vector<8x128xf32>
    %97 = arith.cmpf olt, %95, %96 : vector<8x128xf32>
    %cst_45 = arith.constant -1.000000e+00 : f32
    %cst_46 = arith.constant 1.000000e+00 : f32
    %98 = vector.broadcast %cst_45 : f32 to vector<8x128xf32>
    %99 = vector.broadcast %cst_46 : f32 to vector<8x128xf32>
    %100 = arith.select %97, %98, %99 : vector<8x128xi1>, vector<8x128xf32>
    %101 = math.absf %95 : vector<8x128xf32>
    %cst_47 = arith.constant 0.327591091 : f32
    %102 = vector.broadcast %cst_47 : f32 to vector<8x128xf32>
    %103 = arith.mulf %102, %101 : vector<8x128xf32>
    %cst_48 = arith.constant 1.000000e+00 : f32
    %104 = vector.broadcast %cst_48 : f32 to vector<8x128xf32>
    %105 = arith.addf %104, %103 : vector<8x128xf32>
    %cst_49 = arith.constant 1.000000e+00 : f32
    %106 = vector.broadcast %cst_49 : f32 to vector<8x128xf32>
    %107 = arith.divf %106, %105 : vector<8x128xf32>
    %cst_50 = arith.constant 1.06140542 : f32
    %108 = vector.broadcast %cst_50 : f32 to vector<8x128xf32>
    %109 = arith.mulf %108, %107 : vector<8x128xf32>
    %cst_51 = arith.constant -1.45315206 : f32
    %110 = vector.broadcast %cst_51 : f32 to vector<8x128xf32>
    %111 = arith.addf %109, %110 : vector<8x128xf32>
    %112 = arith.mulf %111, %107 : vector<8x128xf32>
    %cst_52 = arith.constant 1.42141378 : f32
    %113 = vector.broadcast %cst_52 : f32 to vector<8x128xf32>
    %114 = arith.addf %112, %113 : vector<8x128xf32>
    %115 = arith.mulf %114, %107 : vector<8x128xf32>
    %cst_53 = arith.constant -0.284496725 : f32
    %116 = vector.broadcast %cst_53 : f32 to vector<8x128xf32>
    %117 = arith.addf %115, %116 : vector<8x128xf32>
    %118 = arith.mulf %117, %107 : vector<8x128xf32>
    %cst_54 = arith.constant 0.254829586 : f32
    %119 = vector.broadcast %cst_54 : f32 to vector<8x128xf32>
    %120 = arith.addf %118, %119 : vector<8x128xf32>
    %121 = arith.mulf %120, %107 : vector<8x128xf32>
    %cst_55 = arith.constant 0.000000e+00 : f32
    %122 = vector.broadcast %cst_55 : f32 to vector<8x128xf32>
    %123 = arith.subf %122, %101 : vector<8x128xf32>
    %124 = arith.mulf %123, %101 : vector<8x128xf32>
    %125 = math.exp %124 : vector<8x128xf32>
    %126 = arith.mulf %121, %125 : vector<8x128xf32>
    %cst_56 = arith.constant 1.000000e+00 : f32
    %127 = vector.broadcast %cst_56 : f32 to vector<8x128xf32>
    %128 = arith.subf %127, %126 : vector<8x128xf32>
    %129 = arith.mulf %100, %128 : vector<8x128xf32>
    %cst_57 = arith.constant 1.000000e+00 : f32
    %130 = vector.broadcast %cst_57 : f32 to vector<8x128xf32>
    %131 = arith.addf %130, %129 : vector<8x128xf32>
    %132 = arith.mulf %93, %131 : vector<8x128xf32>
    %c3 = arith.constant 3 : index
    %c0_58 = arith.constant 0 : index
    %c0_59 = arith.constant 0 : index
    %133 = vector.load %arg2[%c3, %c0_58, %c0_59] : memref<4x128x128xf32, #tpu.memory_space<vmem>>, vector<1x128x128xf32>
    %134 = vector.shape_cast %133 : vector<1x128x128xf32> to vector<128x128xf32>
    %cst_60 = arith.constant dense<0.000000e+00> : vector<8x128xf32>
    %135 = tpu.matmul %132, %134, %cst_60 {dimension_numbers = #tpu.dot_dimension_numbers<[1], [0], [0], [1], [0, 0, 1, 1], [], []>} : vector<8x128xf32>, vector<128x128xf32>, vector<8x128xf32> -> vector<8x128xf32>
    %c0_61 = arith.constant 0 : index
    %c0_62 = arith.constant 0 : index
    %136 = vector.load %arg3[%c0_61, %c0_62] : memref<8x128xf32, #tpu.memory_space<vmem>>, vector<8x128xf32>
    tpu.vector_store %arg3[%c0_61, %c0_62], %135 {strides = array<i32>} : memref<8x128xf32, #tpu.memory_space<vmem>>, vector<8x128xf32>,
    return
  }
  func.func @transform_0(%arg0: i32) -> (i32, i32) {
    %c0_i32 = arith.constant 0 : i32
    %c0_i32_0 = arith.constant 0 : i32
    return %arg0, %c0_i32 : i32, i32
  }
  func.func @transform_1(%arg0: i32) -> (i32, i32, i32) {
    %c0_i32 = arith.constant 0 : i32
    %c0_i32_0 = arith.constant 0 : i32
    %c0_i32_1 = arith.constant 0 : i32
    %c0_i32_2 = arith.constant 0 : i32
    return %c0_i32, %c0_i32_0, %c0_i32_1 : i32, i32, i32
  }
  func.func @transform_2(%arg0: i32) -> (i32, i32) {
    %c0_i32 = arith.constant 0 : i32
    %c0_i32_0 = arith.constant 0 : i32
    return %arg0, %c0_i32 : i32, i32
  }
}

</mosaic_0001>

<llo_original>
// kernel: tpu_custom_call.1
$region0: #{tpu_custom_call.1}
  #allocation0 [shape = 'u32[]', space=smem, size = 0x4, offset = 0x4, fixed_abs, tag = 'smem constant byte address 0x4 - core index']
  #allocation1 [shape = 'u32[144,128]{1,0:T(1,128)}', space=vmem, size = 0x12000, scoped, tag = 'internal scratch']
  %s0 = inlined_call_operand.hbm [shape: f32[16,128], index: 0, kind: input, shape index: {}]
  %s1 = inlined_call_operand.hbm [shape: f32[4,128,128], index: 1, kind: input, shape index: {}]
  %s2 = inlined_call_operand.hbm [shape: f32[16,128], index: 2, kind: output, shape index: {}]
  %s3 = sld [smem:[#allocation0]]
  $region49: #{tpu_custom_call.1} parent=0
    _
  %s5 = ssub.s32 1, %s3
  %s6 = scalar_select 0, %s5, %s3
  $region1: #{tpu_custom_call.1} parent=0
    #allocation2 [shape = 'u8[8192]{0}', space=vmem, size = 0x2000, scoped, tag = 'input window, operand 0']
    #allocation3 [shape = 's32[2]{0}', space=sflag, size = 0x8, scoped, tag = 'scoped memory for tpu_custom_call.1']
    #allocation4 [shape = 's32[2]{0}', space=sflag, size = 0x8, scoped, tag = 'scoped memory for tpu_custom_call.1']
    #allocation5 [shape = 'u8[262144]{0}', space=vmem, size = 0x40000, scoped, tag = 'input window, operand 1, single buffered']
    #allocation6 [shape = 's32[1]{0}', space=sflag, size = 0x4, scoped, tag = 'scoped memory for tpu_custom_call.1']
    #allocation7 [shape = 'u8[8192]{0}', space=vmem, size = 0x2000, scoped, tag = 'output window, operand 0']
    %7 = vsyncpa [#allocation3], 0
    %s8 = scalar_lea.sflag [#allocation3], 1
    %9 = vsyncpa %s8, 0
    %10 = vsyncpa [#allocation6], 0
    %11 = vsyncpa [#allocation4], 0
    %s12 = scalar_lea.sflag [#allocation4], 1
    %13 = vsyncpa %s12, 0
    loop: start=0, step=1, limit=4
    $region2: #{tpu_custom_call.1} parent=1 // loop_pre_header
      _
    $region3: #{tpu_custom_call.1} parent=1 // loop_header
      %s15 = sphi 0, %s19
      %p16 = scmp.ge.s32.totalorder %s15, 4
      %s25 = sphi 0, %s27
      %s28 = sphi 0, %s25
      %s29 = sphi 0, %s28
      %s45 = sphi 0, %s29
      %s49 = sphi 0, %s49
      %s51 = sphi 0, %s49
      %s52 = sphi 0, %s51
      %s66 = sphi 0, %s52
      %s72 = sphi 0, %s74
      %s75 = sphi 0, %s72
      %s76 = sphi 0, %s75
      %s92 = sphi 0, %s76
    $region4: #{tpu_custom_call.1} parent=1 // loop_header_branch
      %18 = sbr.rel (%p16) target = $region8
    $region5: #{tpu_custom_call.1} parent=1 // loop_body
      %s20 = ssub.s32 %s15, 1
      %s21 = ssub.s32 %s15, 2
      %s22 = sadd.s32 %s15, 1
      %s23 = ssub.s32 %s15, %s22
      %p24 = scmp.eq.s32.totalorder %s23, 0
      %s26 = sadd.s32 %s25, 1
      %s27 = scalar_select %p24, %s25, %s26
      %p30 = pneg %p24
      %p31 = scmp.eq.s32.totalorder %s15, 1
      %p32 = por %p30, %p31
      %p33 = scmp.ne.s32.totalorder %s25, %s28
      %p34 = scmp.eq.s32.totalorder %s15, 0
      %p35 = por %p33, %p34
      %p36 = scmp.ne.s32.totalorder %s25, %s28
      %p37 = scmp.eq.s32.totalorder %s20, 1
      %p38 = por %p36, %p37
      %p39 = scmp.ne.s32.totalorder %s28, %s29
      %p40 = scmp.eq.s32.totalorder %s20, 0
      %p41 = por %p39, %p40
      %p42 = scmp.ne.s32.totalorder %s28, %s29
      %p43 = scmp.eq.s32.totalorder %s21, 1
      %p44 = por %p42, %p43
      %p46 = scmp.ne.s32.totalorder %s29, %s45
      %p47 = scmp.eq.s32.totalorder %s21, 0
      %p48 = por %p46, %p47
      %s50 = sadd.s32 %s49, 1
      %p53 = scmp.eq.s32.totalorder %s15, 1
      %p54 = scmp.ne.s32.totalorder %s49, %s51
      %p55 = scmp.eq.s32.totalorder %s15, 0
      %p56 = por %p54, %p55
      %p57 = scmp.ne.s32.totalorder %s49, %s51
      %p58 = scmp.eq.s32.totalorder %s20, 1
      %p59 = por %p57, %p58
      %p60 = scmp.ne.s32.totalorder %s51, %s52
      %p61 = scmp.eq.s32.totalorder %s20, 0
      %p62 = por %p60, %p61
      %p63 = scmp.ne.s32.totalorder %s51, %s52
      %p64 = scmp.eq.s32.totalorder %s21, 1
      %p65 = por %p63, %p64
      %p67 = scmp.ne.s32.totalorder %s52, %s66
      %p68 = scmp.eq.s32.totalorder %s21, 0
      %p69 = por %p67, %p68
      %s70 = ssub.s32 %s15, %s22
      %p71 = scmp.eq.s32.totalorder %s70, 0
      %s73 = sadd.s32 %s72, 1
      %s74 = scalar_select %p71, %s72, %s73
      %p77 = pneg %p71
      %p78 = scmp.eq.s32.totalorder %s15, 1
      %p79 = por %p77, %p78
      %p80 = scmp.ne.s32.totalorder %s72, %s75
      %p81 = scmp.eq.s32.totalorder %s15, 0
      %p82 = por %p80, %p81
      %p83 = scmp.ne.s32.totalorder %s72, %s75
      %p84 = scmp.eq.s32.totalorder %s20, 1
      %p85 = por %p83, %p84
      %p86 = scmp.ne.s32.totalorder %s75, %s76
      %p87 = scmp.eq.s32.totalorder %s20, 0
      %p88 = por %p86, %p87
      %p89 = scmp.ne.s32.totalorder %s75, %s76
      %p90 = scmp.eq.s32.totalorder %s21, 1
      %p91 = por %p89, %p90
      %p93 = scmp.ne.s32.totalorder %s76, %s92
      %p94 = scmp.eq.s32.totalorder %s21, 0
      %p95 = por %p93, %p94
      %p96 = scmp.le.s32.totalorder 1, %s15
      %p97 = scmp.lt.s32.totalorder %s15, 3
      %p98 = pnand %p96, %p97
      %p99 = pneg %p98
      // Predicated region
      $region9: #{tpu_custom_call.1} parent=5 // pred_check
        _
      $region10: #{tpu_custom_call.1} parent=5 // pred_check_branch
        %101 = sbr.rel (%p98) target = $region12
      $region11: #{tpu_custom_call.1} parent=5 // pred_region
        %s102 = ssub.s32 %s15, 1
        // Predicated region
        $region13: #{tpu_custom_call.1} parent=11 // pred_check
          %p103 = pneg %p62
        $region14: #{tpu_custom_call.1} parent=11 // pred_check_branch
          %105 = sbr.rel (%p103) target = $region16
        $region15: #{tpu_custom_call.1} parent=11 // pred_region
          %s107 = ssub.s32 8192, 8192
          %108 = vsyncadd [#allocation6], %s107
          %s109 = sshll.u32 [#allocation5], 4
          %s110 = int_to_ptr.vmem [resolvable:$true] %s109
          %115 = dma.hbm_to_vmem [thread:$0]  %s1, 8192, %s110, [#allocation6], 128, 128, 8
        $region16: #{tpu_custom_call.1} parent=11 // pred_fallthru
          _
      $region12: #{tpu_custom_call.1} parent=5 // pred_fallthru
        _
      %p116 = scmp.lt.s32.totalorder %s15, 2
      // Predicated region
      $region17: #{tpu_custom_call.1} parent=5 // pred_check
        %p117 = pneg %p116
      $region18: #{tpu_custom_call.1} parent=5 // pred_check_branch
        %119 = sbr.rel (%p117) target = $region20
      $region19: #{tpu_custom_call.1} parent=5 // pred_region
        // Predicated region
        $region21: #{tpu_custom_call.1} parent=19 // pred_check
          %p120 = pneg %p35
        $region22: #{tpu_custom_call.1} parent=19 // pred_check_branch
          %122 = sbr.rel (%p120) target = $region24
        $region23: #{tpu_custom_call.1} parent=19 // pred_region
          %s123 = sand.u32 %s25, 1
          %s124 = scalar_lea.sflag [#allocation3], %s123
          %s125 = sand.u32 %s25, 1
          %s126 = smul.addr %s125, 8
          %s127 = scalar_lea.vmem [#allocation2], %s126
          %s129 = ssub.s32 128, 128
          %130 = vsyncadd %s124, %s129
          %s131 = smul.addr %s15, 128
          %s132 = scalar_lea.hbm %s0, %s131
          %s134 = sshll.u32 %s127, 4
          %s135 = int_to_ptr.vmem [resolvable:$true] %s134
          %137 = dma.hbm_to_vmem [thread:$0]  %s132, 128, %s135, %s124
        $region24: #{tpu_custom_call.1} parent=19 // pred_fallthru
          _
      $region20: #{tpu_custom_call.1} parent=5 // pred_fallthru
        _
      %p138 = scmp.le.s32.totalorder 1, %s15
      %p139 = scmp.lt.s32.totalorder %s15, 3
      %p140 = pnand %p138, %p139
      %p141 = pneg %p140
      // Predicated region
      $region25: #{tpu_custom_call.1} parent=5 // pred_check
        _
      $region26: #{tpu_custom_call.1} parent=5 // pred_check_branch
        %143 = sbr.rel (%p140) target = $region28
      $region27: #{tpu_custom_call.1} parent=5 // pred_region
        %s144 = ssub.s32 %s15, 1
        %s145 = sand.u32 %s28, 1
        %s146 = scalar_lea.sflag [#allocation3], %s145
        %s147 = sand.u32 %s28, 1
        %s148 = smul.addr %s147, 8
        %s149 = scalar_lea.vmem [#allocation2], %s148
        // Predicated region
        $region29: #{tpu_custom_call.1} parent=27 // pred_check
          %p150 = pneg %p41
        $region30: #{tpu_custom_call.1} parent=27 // pred_check_branch
          %152 = sbr.rel (%p150) target = $region32
        $region31: #{tpu_custom_call.1} parent=27 // pred_region
          %153 = dma.done %s146, 128
        $region32: #{tpu_custom_call.1} parent=27 // pred_fallthru
          _
        // Predicated region
        $region33: #{tpu_custom_call.1} parent=27 // pred_check
          %p154 = pneg %p62
        $region34: #{tpu_custom_call.1} parent=27 // pred_check_branch
          %156 = sbr.rel (%p154) target = $region36
        $region35: #{tpu_custom_call.1} parent=27 // pred_region
          %157 = dma.done [#allocation6], 8192
        $region36: #{tpu_custom_call.1} parent=27 // pred_fallthru
          _
        %s158 = sand.u32 %s28, 1
        %s159 = scalar_lea.sflag [#allocation3], %s158
        %s160 = sand.u32 %s28, 1
        %s161 = smul.addr %s160, 8
        %s162 = scalar_lea.vmem [#allocation2], %s161
        %p163 = pneg %p41
        %p164 = pneg %p38
        %p165 = pneg %p62
        %p166 = pneg %p59
        %p167 = pneg %p88
        %p168 = pneg %p85
        %s169 = sand.u32 %s75, 1
        %s170 = scalar_lea.sflag [#allocation4], %s169
        %s171 = sand.u32 %s75, 1
        %s172 = smul.addr %s171, 8
        %s173 = scalar_lea.vmem [#allocation7], %s172
        %v174 = vld [vmem:[%s149] sm:$0xff]
        %v175 = vld [vmem:[#allocation5] sm:$0xff]
        %v176 = vld [vmem:[#allocation5 + $0x8] sm:$0xff]
        %v177 = vld [vmem:[#allocation5 + $0x10] sm:$0xff]
        %v178 = vld [vmem:[#allocation5 + $0x18] sm:$0xff]
        %v179 = vld [vmem:[#allocation5 + $0x20] sm:$0xff]
        %v180 = vld [vmem:[#allocation5 + $0x28] sm:$0xff]
        %v181 = vld [vmem:[#allocation5 + $0x30] sm:$0xff]
        %v182 = vld [vmem:[#allocation5 + $0x38] sm:$0xff]
        %v183 = vld [vmem:[#allocation5 + $0x40] sm:$0xff]
        %v184 = vld [vmem:[#allocation5 + $0x48] sm:$0xff]
        %v185 = vld [vmem:[#allocation5 + $0x50] sm:$0xff]
        %v186 = vld [vmem:[#allocation5 + $0x58] sm:$0xff]
        %v187 = vld [vmem:[#allocation5 + $0x60] sm:$0xff]
        %v188 = vld [vmem:[#allocation5 + $0x68] sm:$0xff]
        %v189 = vld [vmem:[#allocation5 + $0x70] sm:$0xff]
        %v190 = vld [vmem:[#allocation5 + $0x78] sm:$0xff]
        %191 = vmatprep.subr.mxu0 0.0
        %192 = vmatpush1.msra.mxu0 %v175
        %193 = vmatprep.subr.mxu0 0.0
        %194 = vmatpush1.msra.mxu0 %v176
        %195 = vmatprep.subr.mxu0 0.0
        %196 = vmatpush1.msra.mxu0 %v177
        %197 = vmatprep.subr.mxu0 0.0
        %198 = vmatpush1.msra.mxu0 %v178
        %199 = vmatprep.subr.mxu0 0.0
        %200 = vmatpush1.msra.mxu0 %v179
        %201 = vmatprep.subr.mxu0 0.0
        %202 = vmatpush1.msra.mxu0 %v180
        %203 = vmatprep.subr.mxu0 0.0
        %204 = vmatpush1.msra.mxu0 %v181
        %205 = vmatprep.subr.mxu0 0.0
        %206 = vmatpush1.msra.mxu0 %v182
        %207 = vmatprep.subr.mxu0 0.0
        %208 = vmatpush1.msra.mxu0 %v183
        %209 = vmatprep.subr.mxu0 0.0
        %210 = vmatpush1.msra.mxu0 %v184
        %211 = vmatprep.subr.mxu0 0.0
        %212 = vmatpush1.msra.mxu0 %v185
        %213 = vmatprep.subr.mxu0 0.0
        %214 = vmatpush1.msra.mxu0 %v186
        %215 = vmatprep.subr.mxu0 0.0
        %216 = vmatpush1.msra.mxu0 %v187
        %217 = vmatprep.subr.mxu0 0.0
        %218 = vmatpush1.msra.mxu0 %v188
        %219 = vmatprep.subr.mxu0 0.0
        %220 = vmatpush1.msra.mxu0 %v189
        %221 = vmatprep.subr.mxu0 0.0
        %222 = vmatpush1.msra.mxu0 %v190
        %223 = vmatprep.subr.mxu0 0.0
        %224 = vmatpush1.msra.mxu0 0.0
        %225 = vmatprep.subr.mxu0 0.0
        %226 = vmatpush1.msra.mxu0 0.0
        %227 = vmatprep.subr.mxu0 0.0
        %228 = vmatpush1.msra.mxu0 0.0
        %229 = vmatprep.subr.mxu0 0.0
        %230 = vmatpush1.msra.mxu0 0.0
        %231 = vmatprep.subr.mxu0 0.0
        %232 = vmatpush1.msra.mxu0 0.0
        %233 = vmatprep.subr.mxu0 0.0
        %234 = vmatpush1.msra.mxu0 0.0
        %235 = vmatprep.subr.mxu0 0.0
        %236 = vmatpush1.msra.mxu0 0.0
        %237 = vmatprep.subr.mxu0 0.0
        %238 = vmatpush1.msra.mxu0 0.0
        %239 = vmatprep.subr.mxu0 0.0
        %240 = vmatpush1.msra.mxu0 0.0
        %241 = vmatprep.subr.mxu0 0.0
        %242 = vmatpush1.msra.mxu0 0.0
        %243 = vmatprep.subr.mxu0 0.0
        %244 = vmatpush1.msra.mxu0 0.0
        %245 = vmatprep.subr.mxu0 0.0
        %246 = vmatpush1.msra.mxu0 0.0
        %247 = vmatprep.subr.mxu0 0.0
        %248 = vmatpush1.msra.mxu0 0.0
        %249 = vmatprep.subr.mxu0 0.0
        %250 = vmatpush1.msra.mxu0 0.0
        %251 = vmatprep.subr.mxu0 0.0
        %252 = vmatpush1.msra.mxu0 0.0
        %253 = vmatprep.subr.mxu0 0.0
        %254 = vmatpush1.msra.mxu0 0.0
        %255 = vmatprep.mubr.f32.mxu0 0.0
        %256 = vmatmul.mubr.f32.gmra.mrb[0].mxu0 %v174
        %v257 = vpop.f32.mrb[0].mxu0
        %v258 = vadd.f32 0.0, %v257
        %v259 = vpop.f32.mrb[0].mxu0
        %260 = vdwg.mxu0
        %v261 = vmul.f32 %v258, 0.5
        %v262 = vmul.f32 %v258, 0.70710677
        %vm263 = vcmp.lt.f32.partialorder %v262, 0.0
        %v264 = vsel %vm263, -1.0, 1.0
        %v265 = vand.u32 2147483647, %v262
        %v266 = vmul.f32 %v265, 0.3275911
        %v267 = vadd.f32 %v266, 1.0
        %v268 = vrcp.pop %v267
        %v269 = vmul.f32 1.0, %v268
        %v270 = vmul.f32 %v269, 1.0614054
        %v271 = vadd.f32 %v270, -1.4531521
        %v272 = vmul.f32 %v271, %v269
        %v273 = vadd.f32 %v272, 1.4214138
        %v274 = vmul.f32 %v273, %v269
        %v275 = vadd.f32 %v274, -0.28449672
        %v276 = vmul.f32 %v275, %v269
        %v277 = vadd.f32 %v276, 0.2548296
        %v278 = vmul.f32 %v277, %v269
        %v279 = vsub.f32 0.0, %v265
        %v280 = vmul.f32 %v279, %v265
        %v281 = vmul.f32 %v280, 1.442695
        %v282 = vpow.pop %v281
        %v283 = vmul.f32 %v278, %v282
        %v284 = vsub.f32 1.0, %v283
        %v285 = vmul.f32 %v264, %v284
        %v286 = vadd.f32 %v285, 1.0
        %v287 = vmul.f32 %v261, %v286
        %s288 = scalar_lea.vmem [#allocation5], 128
        %v289 = vld [vmem:[%s288] sm:$0xff]
        %v290 = vld [vmem:[%s288 + $0x8] sm:$0xff]
        %v291 = vld [vmem:[%s288 + $0x10] sm:$0xff]
        %v292 = vld [vmem:[%s288 + $0x18] sm:$0xff]
        %v293 = vld [vmem:[%s288 + $0x20] sm:$0xff]
        %v294 = vld [vmem:[%s288 + $0x28] sm:$0xff]
        %v295 = vld [vmem:[%s288 + $0x30] sm:$0xff]
        %v296 = vld [vmem:[%s288 + $0x38] sm:$0xff]
        %v297 = vld [vmem:[%s288 + $0x40] sm:$0xff]
        %v298 = vld [vmem:[%s288 + $0x48] sm:$0xff]
        %v299 = vld [vmem:[%s288 + $0x50] sm:$0xff]
        %v300 = vld [vmem:[%s288 + $0x58] sm:$0xff]
        %v301 = vld [vmem:[%s288 + $0x60] sm:$0xff]
        %v302 = vld [vmem:[%s288 + $0x68] sm:$0xff]
        %v303 = vld [vmem:[%s288 + $0x70] sm:$0xff]
        %v304 = vld [vmem:[%s288 + $0x78] sm:$0xff]
        %305 = vmatprep.subr.mxu0 0.0
        %306 = vmatpush1.msra.mxu0 %v289
        %307 = vmatprep.subr.mxu0 0.0
        %308 = vmatpush1.msra.mxu0 %v290
        %309 = vmatprep.subr.mxu0 0.0
        %310 = vmatpush1.msra.mxu0 %v291
        %311 = vmatprep.subr.mxu0 0.0
        %312 = vmatpush1.msra.mxu0 %v292
        %313 = vmatprep.subr.mxu0 0.0
        %314 = vmatpush1.msra.mxu0 %v293
        %315 = vmatprep.subr.mxu0 0.0
        %316 = vmatpush1.msra.mxu0 %v294
        %317 = vmatprep.subr.mxu0 0.0
        %318 = vmatpush1.msra.mxu0 %v295
        %319 = vmatprep.subr.mxu0 0.0
        %320 = vmatpush1.msra.mxu0 %v296
        %321 = vmatprep.subr.mxu0 0.0
        %322 = vmatpush1.msra.mxu0 %v297
        %323 = vmatprep.subr.mxu0 0.0
        %324 = vmatpush1.msra.mxu0 %v298
        %325 = vmatprep.subr.mxu0 0.0
        %326 = vmatpush1.msra.mxu0 %v299
        %327 = vmatprep.subr.mxu0 0.0
        %328 = vmatpush1.msra.mxu0 %v300
        %329 = vmatprep.subr.mxu0 0.0
        %330 = vmatpush1.msra.mxu0 %v301
        %331 = vmatprep.subr.mxu0 0.0
        %332 = vmatpush1.msra.mxu0 %v302
        %333 = vmatprep.subr.mxu0 0.0
        %334 = vmatpush1.msra.mxu0 %v303
        %335 = vmatprep.subr.mxu0 0.0
        %336 = vmatpush1.msra.mxu0 %v304
        %337 = vmatprep.subr.mxu0 0.0
        %338 = vmatpush1.msra.mxu0 0.0
        %339 = vmatprep.subr.mxu0 0.0
        %340 = vmatpush1.msra.mxu0 0.0
        %341 = vmatprep.subr.mxu0 0.0
        %342 = vmatpush1.msra.mxu0 0.0
        %343 = vmatprep.subr.mxu0 0.0
        %344 = vmatpush1.msra.mxu0 0.0
        %345 = vmatprep.subr.mxu0 0.0
        %346 = vmatpush1.msra.mxu0 0.0
        %347 = vmatprep.subr.mxu0 0.0
        %348 = vmatpush1.msra.mxu0 0.0
        %349 = vmatprep.subr.mxu0 0.0
        %350 = vmatpush1.msra.mxu0 0.0
        %351 = vmatprep.subr.mxu0 0.0
        %352 = vmatpush1.msra.mxu0 0.0
        %353 = vmatprep.subr.mxu0 0.0
        %354 = vmatpush1.msra.mxu0 0.0
        %355 = vmatprep.subr.mxu0 0.0
        %356 = vmatpush1.msra.mxu0 0.0
        %357 = vmatprep.subr.mxu0 0.0
        %358 = vmatpush1.msra.mxu0 0.0
        %359 = vmatprep.subr.mxu0 0.0
        %360 = vmatpush1.msra.mxu0 0.0
        %361 = vmatprep.subr.mxu0 0.0
        %362 = vmatpush1.msra.mxu0 0.0
        %363 = vmatprep.subr.mxu0 0.0
        %364 = vmatpush1.msra.mxu0 0.0
        %365 = vmatprep.subr.mxu0 0.0
        %366 = vmatpush1.msra.mxu0 0.0
        %367 = vmatprep.subr.mxu0 0.0
        %368 = vmatpush1.msra.mxu0 0.0
        %369 = vmatprep.mubr.f32.mxu0 0.0
        %370 = vmatmul.mubr.f32.gmra.mrb[0].mxu0 %v287
        %v371 = vpop.f32.mrb[0].mxu0
        %v372 = vadd.f32 0.0, %v371
        %v373 = vpop.f32.mrb[0].mxu0
        %374 = vdwg.mxu0
        %v375 = vmul.f32 %v372, 0.5
        %v376 = vmul.f32 %v372, 0.70710677
        %vm377 = vcmp.lt.f32.partialorder %v376, 0.0
        %v378 = vsel %vm377, -1.0, 1.0
        %v379 = vand.u32 2147483647, %v376
        %v380 = vmul.f32 %v379, 0.3275911
        %v381 = vadd.f32 %v380, 1.0
        %v382 = vrcp.pop %v381
        %v383 = vmul.f32 1.0, %v382
        %v384 = vmul.f32 %v383, 1.0614054
        %v385 = vadd.f32 %v384, -1.4531521
        %v386 = vmul.f32 %v385, %v383
        %v387 = vadd.f32 %v386, 1.4214138
        %v388 = vmul.f32 %v387, %v383
        %v389 = vadd.f32 %v388, -0.28449672
        %v390 = vmul.f32 %v389, %v383
        %v391 = vadd.f32 %v390, 0.2548296
        %v392 = vmul.f32 %v391, %v383
        %v393 = vsub.f32 0.0, %v379
        %v394 = vmul.f32 %v393, %v379
        %v395 = vmul.f32 %v394, 1.442695
        %v396 = vpow.pop %v395
        %v397 = vmul.f32 %v392, %v396
        %v398 = vsub.f32 1.0, %v397
        %v399 = vmul.f32 %v378, %v398
        %v400 = vadd.f32 %v399, 1.0
        %v401 = vmul.f32 %v375, %v400
        %s402 = scalar_lea.vmem [#allocation5], 256
        %v403 = vld [vmem:[%s402] sm:$0xff]
        %v404 = vld [vmem:[%s402 + $0x8] sm:$0xff]
        %v405 = vld [vmem:[%s402 + $0x10] sm:$0xff]
        %v406 = vld [vmem:[%s402 + $0x18] sm:$0xff]
        %v407 = vld [vmem:[%s402 + $0x20] sm:$0xff]
        %v408 = vld [vmem:[%s402 + $0x28] sm:$0xff]
        %v409 = vld [vmem:[%s402 + $0x30] sm:$0xff]
        %v410 = vld [vmem:[%s402 + $0x38] sm:$0xff]
        %v411 = vld [vmem:[%s402 + $0x40] sm:$0xff]
        %v412 = vld [vmem:[%s402 + $0x48] sm:$0xff]
        %v413 = vld [vmem:[%s402 + $0x50] sm:$0xff]
        %v414 = vld [vmem:[%s402 + $0x58] sm:$0xff]
        %v415 = vld [vmem:[%s402 + $0x60] sm:$0xff]
        %v416 = vld [vmem:[%s402 + $0x68] sm:$0xff]
        %v417 = vld [vmem:[%s402 + $0x70] sm:$0xff]
        %v418 = vld [vmem:[%s402 + $0x78] sm:$0xff]
        %419 = vmatprep.subr.mxu0 0.0
        %420 = vmatpush1.msra.mxu0 %v403
        %421 = vmatprep.subr.mxu0 0.0
        %422 = vmatpush1.msra.mxu0 %v404
        %423 = vmatprep.subr.mxu0 0.0
        %424 = vmatpush1.msra.mxu0 %v405
        %425 = vmatprep.subr.mxu0 0.0
        %426 = vmatpush1.msra.mxu0 %v406
        %427 = vmatprep.subr.mxu0 0.0
        %428 = vmatpush1.msra.mxu0 %v407
        %429 = vmatprep.subr.mxu0 0.0
        %430 = vmatpush1.msra.mxu0 %v408
        %431 = vmatprep.subr.mxu0 0.0
        %432 = vmatpush1.msra.mxu0 %v409
        %433 = vmatprep.subr.mxu0 0.0
        %434 = vmatpush1.msra.mxu0 %v410
        %435 = vmatprep.subr.mxu0 0.0
        %436 = vmatpush1.msra.mxu0 %v411
        %437 = vmatprep.subr.mxu0 0.0
        %438 = vmatpush1.msra.mxu0 %v412
        %439 = vmatprep.subr.mxu0 0.0
        %440 = vmatpush1.msra.mxu0 %v413
        %441 = vmatprep.subr.mxu0 0.0
        %442 = vmatpush1.msra.mxu0 %v414
        %443 = vmatprep.subr.mxu0 0.0
        %444 = vmatpush1.msra.mxu0 %v415
        %445 = vmatprep.subr.mxu0 0.0
        %446 = vmatpush1.msra.mxu0 %v416
        %447 = vmatprep.subr.mxu0 0.0
        %448 = vmatpush1.msra.mxu0 %v417
        %449 = vmatprep.subr.mxu0 0.0
        %450 = vmatpush1.msra.mxu0 %v418
        %451 = vmatprep.subr.mxu0 0.0
        %452 = vmatpush1.msra.mxu0 0.0
        %453 = vmatprep.subr.mxu0 0.0
        %454 = vmatpush1.msra.mxu0 0.0
        %455 = vmatprep.subr.mxu0 0.0
        %456 = vmatpush1.msra.mxu0 0.0
        %457 = vmatprep.subr.mxu0 0.0
        %458 = vmatpush1.msra.mxu0 0.0
        %459 = vmatprep.subr.mxu0 0.0
        %460 = vmatpush1.msra.mxu0 0.0
        %461 = vmatprep.subr.mxu0 0.0
        %462 = vmatpush1.msra.mxu0 0.0
        %463 = vmatprep.subr.mxu0 0.0
        %464 = vmatpush1.msra.mxu0 0.0
        %465 = vmatprep.subr.mxu0 0.0
        %466 = vmatpush1.msra.mxu0 0.0
        %467 = vmatprep.subr.mxu0 0.0
        %468 = vmatpush1.msra.mxu0 0.0
        %469 = vmatprep.subr.mxu0 0.0
        %470 = vmatpush1.msra.mxu0 0.0
        %471 = vmatprep.subr.mxu0 0.0
        %472 = vmatpush1.msra.mxu0 0.0
        %473 = vmatprep.subr.mxu0 0.0
        %474 = vmatpush1.msra.mxu0 0.0
        %475 = vmatprep.subr.mxu0 0.0
        %476 = vmatpush1.msra.mxu0 0.0
        %477 = vmatprep.subr.mxu0 0.0
        %478 = vmatpush1.msra.mxu0 0.0
        %479 = vmatprep.subr.mxu0 0.0
        %480 = vmatpush1.msra.mxu0 0.0
        %481 = vmatprep.subr.mxu0 0.0
        %482 = vmatpush1.msra.mxu0 0.0
        %483 = vmatprep.mubr.f32.mxu0 0.0
        %484 = vmatmul.mubr.f32.gmra.mrb[0].mxu0 %v401
        %v485 = vpop.f32.mrb[0].mxu0
        %v486 = vadd.f32 0.0, %v485
        %v487 = vpop.f32.mrb[0].mxu0
        %488 = vdwg.mxu0
        %v489 = vmul.f32 %v486, 0.5
        %v490 = vmul.f32 %v486, 0.70710677
        %vm491 = vcmp.lt.f32.partialorder %v490, 0.0
        %v492 = vsel %vm491, -1.0, 1.0
        %v493 = vand.u32 2147483647, %v490
        %v494 = vmul.f32 %v493, 0.3275911
        %v495 = vadd.f32 %v494, 1.0
        %v496 = vrcp.pop %v495
        %v497 = vmul.f32 1.0, %v496
        %v498 = vmul.f32 %v497, 1.0614054
        %v499 = vadd.f32 %v498, -1.4531521
        %v500 = vmul.f32 %v499, %v497
        %v501 = vadd.f32 %v500, 1.4214138
        %v502 = vmul.f32 %v501, %v497
        %v503 = vadd.f32 %v502, -0.28449672
        %v504 = vmul.f32 %v503, %v497
        %v505 = vadd.f32 %v504, 0.2548296
        %v506 = vmul.f32 %v505, %v497
        %v507 = vsub.f32 0.0, %v493
        %v508 = vmul.f32 %v507, %v493
        %v509 = vmul.f32 %v508, 1.442695
        %v510 = vpow.pop %v509
        %v511 = vmul.f32 %v506, %v510
        %v512 = vsub.f32 1.0, %v511
        %v513 = vmul.f32 %v492, %v512
        %v514 = vadd.f32 %v513, 1.0
        %v515 = vmul.f32 %v489, %v514
        %s516 = scalar_lea.vmem [#allocation5], 384
        %v517 = vld [vmem:[%s516] sm:$0xff]
        %v518 = vld [vmem:[%s516 + $0x8] sm:$0xff]
        %v519 = vld [vmem:[%s516 + $0x10] sm:$0xff]
        %v520 = vld [vmem:[%s516 + $0x18] sm:$0xff]
        %v521 = vld [vmem:[%s516 + $0x20] sm:$0xff]
        %v522 = vld [vmem:[%s516 + $0x28] sm:$0xff]
        %v523 = vld [vmem:[%s516 + $0x30] sm:$0xff]
        %v524 = vld [vmem:[%s516 + $0x38] sm:$0xff]
        %v525 = vld [vmem:[%s516 + $0x40] sm:$0xff]
        %v526 = vld [vmem:[%s516 + $0x48] sm:$0xff]
        %v527 = vld [vmem:[%s516 + $0x50] sm:$0xff]
        %v528 = vld [vmem:[%s516 + $0x58] sm:$0xff]
        %v529 = vld [vmem:[%s516 + $0x60] sm:$0xff]
        %v530 = vld [vmem:[%s516 + $0x68] sm:$0xff]
        %v531 = vld [vmem:[%s516 + $0x70] sm:$0xff]
        %v532 = vld [vmem:[%s516 + $0x78] sm:$0xff]
        %533 = vmatprep.subr.mxu0 0.0
        %534 = vmatpush1.msra.mxu0 %v517
        %535 = vmatprep.subr.mxu0 0.0
        %536 = vmatpush1.msra.mxu0 %v518
        %537 = vmatprep.subr.mxu0 0.0
        %538 = vmatpush1.msra.mxu0 %v519
        %539 = vmatprep.subr.mxu0 0.0
        %540 = vmatpush1.msra.mxu0 %v520
        %541 = vmatprep.subr.mxu0 0.0
        %542 = vmatpush1.msra.mxu0 %v521
        %543 = vmatprep.subr.mxu0 0.0
        %544 = vmatpush1.msra.mxu0 %v522
        %545 = vmatprep.subr.mxu0 0.0
        %546 = vmatpush1.msra.mxu0 %v523
        %547 = vmatprep.subr.mxu0 0.0
        %548 = vmatpush1.msra.mxu0 %v524
        %549 = vmatprep.subr.mxu0 0.0
        %550 = vmatpush1.msra.mxu0 %v525
        %551 = vmatprep.subr.mxu0 0.0
        %552 = vmatpush1.msra.mxu0 %v526
        %553 = vmatprep.subr.mxu0 0.0
        %554 = vmatpush1.msra.mxu0 %v527
        %555 = vmatprep.subr.mxu0 0.0
        %556 = vmatpush1.msra.mxu0 %v528
        %557 = vmatprep.subr.mxu0 0.0
        %558 = vmatpush1.msra.mxu0 %v529
        %559 = vmatprep.subr.mxu0 0.0
        %560 = vmatpush1.msra.mxu0 %v530
        %561 = vmatprep.subr.mxu0 0.0
        %562 = vmatpush1.msra.mxu0 %v531
        %563 = vmatprep.subr.mxu0 0.0
        %564 = vmatpush1.msra.mxu0 %v532
        %565 = vmatprep.subr.mxu0 0.0
        %566 = vmatpush1.msra.mxu0 0.0
        %567 = vmatprep.subr.mxu0 0.0
        %568 = vmatpush1.msra.mxu0 0.0
        %569 = vmatprep.subr.mxu0 0.0
        %570 = vmatpush1.msra.mxu0 0.0
        %571 = vmatprep.subr.mxu0 0.0
        %572 = vmatpush1.msra.mxu0 0.0
        %573 = vmatprep.subr.mxu0 0.0
        %574 = vmatpush1.msra.mxu0 0.0
        %575 = vmatprep.subr.mxu0 0.0
        %576 = vmatpush1.msra.mxu0 0.0
        %577 = vmatprep.subr.mxu0 0.0
        %578 = vmatpush1.msra.mxu0 0.0
        %579 = vmatprep.subr.mxu0 0.0
        %580 = vmatpush1.msra.mxu0 0.0
        %581 = vmatprep.subr.mxu0 0.0
        %582 = vmatpush1.msra.mxu0 0.0
        %583 = vmatprep.subr.mxu0 0.0
        %584 = vmatpush1.msra.mxu0 0.0
        %585 = vmatprep.subr.mxu0 0.0
        %586 = vmatpush1.msra.mxu0 0.0
        %587 = vmatprep.subr.mxu0 0.0
        %588 = vmatpush1.msra.mxu0 0.0
        %589 = vmatprep.subr.mxu0 0.0
        %590 = vmatpush1.msra.mxu0 0.0
        %591 = vmatprep.subr.mxu0 0.0
        %592 = vmatpush1.msra.mxu0 0.0
        %593 = vmatprep.subr.mxu0 0.0
        %594 = vmatpush1.msra.mxu0 0.0
        %595 = vmatprep.subr.mxu0 0.0
        %596 = vmatpush1.msra.mxu0 0.0
        %597 = vmatprep.mubr.f32.mxu0 0.0
        %598 = vmatmul.mubr.f32.gmra.mrb[0].mxu0 %v515
        %v599 = vpop.f32.mrb[0].mxu0
        %v600 = vadd.f32 0.0, %v599
        %v601 = vpop.f32.mrb[0].mxu0
        %602 = vdwg.mxu0
        %603 = vst [vmem:[%s173] sm:$0xff] %v600
        %s604 = sand.u32 %s75, 1
        %s605 = scalar_lea.sflag [#allocation4], %s604
        %s606 = sand.u32 %s75, 1
        %s607 = smul.addr %s606, 8
        %s608 = scalar_lea.vmem [#allocation7], %s607
        // Predicated region
        $region37: #{tpu_custom_call.1} parent=27 // pred_check
          %p609 = pneg %p85
        $region38: #{tpu_custom_call.1} parent=27 // pred_check_branch
          %611 = sbr.rel (%p609) target = $region40
        $region39: #{tpu_custom_call.1} parent=27 // pred_region
          %s613 = ssub.s32 128, 128
          %614 = vsyncadd %s605, %s613
          %s615 = smul.addr %s20, 128
          %s616 = scalar_lea.hbm %s2, %s615
          %s618 = sshll.u32 %s608, 4
          %s619 = int_to_ptr.vmem [resolvable:$true] %s618
          %621 = dma.vmem_to_hbm [thread:$0]  %s619, 128, %s616, %s605
        $region40: #{tpu_custom_call.1} parent=27 // pred_fallthru
          _
      $region28: #{tpu_custom_call.1} parent=5 // pred_fallthru
        _
      %p622 = scmp.le.s32.totalorder 2, %s15
      // Predicated region
      $region41: #{tpu_custom_call.1} parent=5 // pred_check
        %p623 = pneg %p622
      $region42: #{tpu_custom_call.1} parent=5 // pred_check_branch
        %625 = sbr.rel (%p623) target = $region44
      $region43: #{tpu_custom_call.1} parent=5 // pred_region
        %s626 = ssub.s32 %s15, 2
        // Predicated region
        $region45: #{tpu_custom_call.1} parent=43 // pred_check
          %p627 = pneg %p91
        $region46: #{tpu_custom_call.1} parent=43 // pred_check_branch
          %629 = sbr.rel (%p627) target = $region48
        $region47: #{tpu_custom_call.1} parent=43 // pred_region
          %s630 = sand.u32 %s76, 1
          %s631 = scalar_lea.sflag [#allocation4], %s630
          %s632 = sand.u32 %s76, 1
          %s633 = smul.addr %s632, 8
          %s634 = scalar_lea.vmem [#allocation7], %s633
          %635 = dma.done %s631, 128
        $region48: #{tpu_custom_call.1} parent=43 // pred_fallthru
          _
      $region44: #{tpu_custom_call.1} parent=5 // pred_fallthru
        _
    $region6: #{tpu_custom_call.1} parent=1 // loop_footer
      %s19 = sadd.s32 1, %s15
    $region7: #{tpu_custom_call.1} parent=1 // loop_footer_branch
      %14 = sbr.rel target = $region3
    $region8: #{tpu_custom_call.1} parent=1 // loop_exit
      _
    %636 = vsyncpa [#allocation3], 1
    %s637 = scalar_lea.sflag [#allocation3], 1
    %638 = vsyncpa %s637, 1
    %639 = vsyncpa [#allocation6], 1
    %640 = vsyncpa [#allocation4], 1
    %s641 = scalar_lea.sflag [#allocation4], 1
    %642 = vsyncpa %s641, 1

</llo_original>
